<compile_context>
chip_gen: v7x
topology: tpu7x:2x2x1
jax: 0.10.0
libtpu: 0.0.40
codegen_flags: <defaults>
</compile_context>

<pallas_src>
import jax
import jax.numpy as jnp
from jax.experimental import pallas as pl
from jax.experimental.pallas import tpu as pltpu


def _reduce_scatter_kernel(x_ref, o_ref, acc_ref):
    # x_ref  : (tile_n, tile_d) -- rank w's contribution to this output tile
    # o_ref  : (tile_n, tile_d) -- output tile for output-rank r
    # acc_ref: (tile_n, tile_d) f32 accumulator, resident across the w axis
    w = pl.program_id(3)

    @pl.when(w == 0)
    def _():
        acc_ref[...] = jnp.zeros_like(acc_ref)

    acc_ref[...] += x_ref[...].astype(jnp.float32)  # per-rank widen; no slab temp

    @pl.when(w == pl.num_programs(3) - 1)
    def _():
        o_ref[...] = acc_ref[...].astype(o_ref.dtype)  # single write per element


def _vmem_budget_and_limit():
    """Generation-aware (budget, scoped-limit) in bytes."""
    cap = None
    try:
        cap = getattr(pltpu.get_tpu_info(), "vmem_capacity_bytes", None)
    except Exception:
        cap = None
    if not cap:
        cap = 64 * 1024 * 1024  # conservative: v7x per-TC physical VMEM
    budget = cap // 2                                   # ~64 MiB v5e/v6e, ~32 MiB v7x
    limit = min(budget + budget // 2, cap - (8 << 20))  # scoped limit w/ headroom
    limit = max(limit, 32 * 1024 * 1024)
    return budget, limit


def _divisors(n, step):
    return [t for t in range(step, n + 1, step) if n % t == 0]


def _choose_tiles(chunk_rows, d, itemsize, budget_bytes):
    """Pick (tile_n, tile_d) maximizing block size within the VMEM budget.

    Per-step residency ~= tile_n*tile_d * (2*in + 2*out double-buffered + 4B f32 acc).
    tile_d is a multiple of 128 (or full D); tile_n a multiple of 16/8 (or full chunk).
    """
    bytes_per_elem = 4 * itemsize + 4
    max_elems = max(budget_bytes // bytes_per_elem, 8 * 128)

    # Lane (D) candidates: full extent first (longest DMA segments), then
    # progressively smaller multiples of 128.
    d_cands = [d] + sorted((c for c in _divisors(d, 128) if c != d), reverse=True)
    # Row candidates: multiples of 16 (bf16 sublane-pack safe) then 8; full
    # chunk only if no 8-aligned divisor exists (still layout-legal: full dim).
    n_cands = sorted(set(_divisors(chunk_rows, 16) + _divisors(chunk_rows, 8)),
                     reverse=True) or [chunk_rows]

    for tile_d in d_cands:
        max_rows = max_elems // tile_d
        fits = [t for t in n_cands if t <= max_rows]
        if fits:
            return fits[0], tile_d
    # Guarded fallback: smallest legal block (never an over-VMEM full chunk).
    return n_cands[-1], d_cands[-1]


def reduce_scatter_sum(x_all: jax.Array) -> jax.Array:
    """Simulated reduce_scatter_tensor(x, 'sum', dim=0, ranks=[0..W-1]).

    Args:
      x_all: stacked per-rank inputs, shape (W, N, D), N divisible by W.
    Returns:
      (W, N // W, D) -- row r is the tensor rank r would receive.
    """
    W, N, D = x_all.shape
    assert N % W == 0, "scatter dim must be divisible by world size"
    chunk_rows = N // W
    itemsize = x_all.dtype.itemsize

    budget, vmem_limit = _vmem_budget_and_limit()
    tile_n, tile_d = _choose_tiles(chunk_rows, D, itemsize, budget)
    tiles_n = chunk_rows // tile_n
    tiles_d = D // tile_d

    # (W, N, D) -> (W_in, W_out, chunk_rows, D): pure leading-dim split, no copy.
    x4 = x_all.reshape(W, W, chunk_rows, D)

    cost = pl.CostEstimate(
        flops=(W - 1) * N * D,
        transcendentals=0,
        bytes_accessed=(W + 1) * N * D * itemsize,
    )

    out = pl.pallas_call(
        _reduce_scatter_kernel,
        out_shape=jax.ShapeDtypeStruct((W, chunk_rows, D), x_all.dtype),
        grid_spec=pltpu.PrefetchScalarGridSpec(
            num_scalar_prefetch=0,
            grid=(W, tiles_n, tiles_d, W),  # (rank_out, n_tile, d_tile, rank_in)
            in_specs=[
                pl.BlockSpec(
                    (pl.Squeezed(), pl.Squeezed(), tile_n, tile_d),
                    lambda r, t, d, w: (w, r, t, d)),
            ],
            out_specs=pl.BlockSpec(
                (pl.Squeezed(), tile_n, tile_d),
                lambda r, t, d, w: (r, t, d)),  # same block across w -> resident acc
            scratch_shapes=[pltpu.VMEM((tile_n, tile_d), jnp.float32)],
        ),
        compiler_params=pltpu.CompilerParams(
            dimension_semantics=("parallel", "parallel", "parallel", "arbitrary"),
            vmem_limit_bytes=vmem_limit,
        ),
        cost_estimate=cost,
    )(x4)

    return out


if __name__ == "__main__":
    W, N, D = 4, 64, 128  # 4 ranks, per-rank local tensor (64, 128)
    key = jax.random.PRNGKey(0)
    x_all = jax.random.normal(key, (W, N, D), dtype=jnp.float32)

    out = reduce_scatter_sum(x_all)
    jax.block_until_ready(out)
    ref = jnp.sum(x_all, axis=0).reshape(W, N // W, D)
    assert out.shape == (W, N // W, D)
    assert jnp.allclose(out, ref, atol=1e-5, rtol=1e-5)

    # bf16 path: per-rank widen + f32 accumulate, single downcast on store.
    x_bf16 = x_all.astype(jnp.bfloat16)
    out_bf16 = reduce_scatter_sum(x_bf16)
    jax.block_until_ready(out_bf16)
    ref_bf16 = jnp.sum(x_bf16.astype(jnp.float32), axis=0).reshape(
        W, N // W, D).astype(jnp.bfloat16)
    assert jnp.allclose(out_bf16.astype(jnp.float32),
                        ref_bf16.astype(jnp.float32), atol=2e-2, rtol=2e-2)

    # A second (still small) shape through the same tile-selection path.
    x_big = jax.random.normal(jax.random.PRNGKey(1), (W, 256, 512), jnp.float32)
    out_big = reduce_scatter_sum(x_big)
    jax.block_until_ready(out_big)
    ref_big = jnp.sum(x_big, axis=0).reshape(W, 256 // W, 512)
    assert jnp.allclose(out_big, ref_big, atol=1e-4, rtol=1e-4)

    print("KERNEL_OK")
</pallas_src>

<mosaic_0001>
module attributes {stable_mosaic.version = 11 : i64} {
  func.func @_reduce_scatter_kernel(%arg0: i32, %arg1: i32, %arg2: i32, %arg3: i32, %arg4: memref<1x1x16x128xf32, #tpu.memory_space<vmem>>, %arg5: memref<1x16x128xf32, #tpu.memory_space<vmem>>, %arg6: memref<16x128xf32, #tpu.memory_space<vmem>>) attributes {dimension_semantics = [#tpu.dimension_semantics<parallel>, #tpu.dimension_semantics<parallel>, #tpu.dimension_semantics<parallel>, #tpu.dimension_semantics<arbitrary>], iteration_bounds = array<i64: 4, 1, 1, 4>, scalar_prefetch = 0 : i64, scratch_operands = 1 : i64, tpu.core_type = #tpu.core_type<tc>, window_params = [{transform_indices = @transform_0, window_bounds = array<i64: 1, 1, 16, 128>}, {transform_indices = @transform_1, window_bounds = array<i64: 1, 16, 128>}]} {
    %c0_i32 = arith.constant 0 : i32
    %0 = arith.cmpi eq, %arg3, %c0_i32 : i32
    %1 = arith.extui %0 : i1 to i32
    %c0_i32_0 = arith.constant 0 : i32
    %2 = arith.cmpi ne, %1, %c0_i32_0 : i32
    scf.if %2 {
      %cst = arith.constant 0.000000e+00 : f32
      %11 = vector.broadcast %cst : f32 to vector<16x128xf32>
      %c0_9 = arith.constant 0 : index
      %c0_10 = arith.constant 0 : index
      %12 = vector.load %arg6[%c0_9, %c0_10] : memref<16x128xf32, #tpu.memory_space<vmem>>, vector<16x128xf32>
      tpu.vector_store %arg6[%c0_9, %c0_10], %11 {strides = array<i32>} : memref<16x128xf32, #tpu.memory_space<vmem>>, vector<16x128xf32>,
    } else {
    }
    %c0 = arith.constant 0 : index
    %c0_1 = arith.constant 0 : index
    %3 = vector.load %arg6[%c0, %c0_1] : memref<16x128xf32, #tpu.memory_space<vmem>>, vector<16x128xf32>
    %c0_2 = arith.constant 0 : index
    %c0_3 = arith.constant 0 : index
    %c0_4 = arith.constant 0 : index
    %c0_5 = arith.constant 0 : index
    %4 = vector.load %arg4[%c0_2, %c0_3, %c0_4, %c0_5] : memref<1x1x16x128xf32, #tpu.memory_space<vmem>>, vector<1x1x16x128xf32>
    %5 = vector.shape_cast %4 : vector<1x1x16x128xf32> to vector<16x128xf32>
    %6 = arith.addf %3, %5 : vector<16x128xf32>
    %c0_6 = arith.constant 0 : index
    %c0_7 = arith.constant 0 : index
    %7 = vector.load %arg6[%c0_6, %c0_7] : memref<16x128xf32, #tpu.memory_space<vmem>>, vector<16x128xf32>
    tpu.vector_store %arg6[%c0_6, %c0_7], %6 {strides = array<i32>} : memref<16x128xf32, #tpu.memory_space<vmem>>, vector<16x128xf32>,
    %c3_i32 = arith.constant 3 : i32
    %8 = arith.cmpi eq, %arg3, %c3_i32 : i32
    %9 = arith.extui %8 : i1 to i32
    %c0_i32_8 = arith.constant 0 : i32
    %10 = arith.cmpi ne, %9, %c0_i32_8 : i32
    scf.if %10 {
      %c0_9 = arith.constant 0 : index
      %c0_10 = arith.constant 0 : index
      %11 = vector.load %arg6[%c0_9, %c0_10] : memref<16x128xf32, #tpu.memory_space<vmem>>, vector<16x128xf32>
      %c0_11 = arith.constant 0 : index
      %c0_12 = arith.constant 0 : index
      %c0_13 = arith.constant 0 : index
      %12 = vector.load %arg5[%c0_11, %c0_12, %c0_13] : memref<1x16x128xf32, #tpu.memory_space<vmem>>, vector<1x16x128xf32>
      %13 = vector.shape_cast %12 : vector<1x16x128xf32> to vector<16x128xf32>
      %14 = vector.shape_cast %11 : vector<16x128xf32> to vector<1x16x128xf32>
      tpu.vector_store %arg5[%c0_11, %c0_12, %c0_13], %14 {strides = array<i32>} : memref<1x16x128xf32, #tpu.memory_space<vmem>>, vector<1x16x128xf32>,
    } else {
    }
    return
  }
  func.func @transform_0(%arg0: i32, %arg1: i32, %arg2: i32, %arg3: i32) -> (i32, i32, i32, i32) {
    %c0_i32 = arith.constant 0 : i32
    return %arg3, %arg0, %arg1, %arg2 : i32, i32, i32, i32
  }
  func.func @transform_1(%arg0: i32, %arg1: i32, %arg2: i32, %arg3: i32) -> (i32, i32, i32) {
    %c0_i32 = arith.constant 0 : i32
    return %arg0, %arg1, %arg2 : i32, i32, i32
  }
}

</mosaic_0001>

<llo_original>
// kernel: tpu_custom_call.1
$region0: #{tpu_custom_call.1}
  #allocation0 [shape = 'u32[]', space=smem, size = 0x4, offset = 0x4, fixed_abs, tag = 'smem constant byte address 0x4 - core index']
  #allocation1 [shape = 'u32[144,128]{1,0:T(1,128)}', space=vmem, size = 0x12000, scoped, tag = 'internal scratch']
  #allocation2 [shape = 'f32[16,128]{1,0:T(8,128)}', space=vmem, size = 0x2000, scoped, tag = 'scratch operand']
  %s0 = inlined_call_operand.hbm [shape: f32[4,4,16,128], index: 0, kind: input, shape index: {}]
  %s1 = inlined_call_operand.hbm [shape: f32[4,16,128], index: 1, kind: output, shape index: {}]
  %s2 = sld [smem:[#allocation0]]
  $region49: #{tpu_custom_call.1} parent=0
    _
  %s4 = ssub.s32 1, %s2
  %s5 = scalar_select 0, %s4, %s2
  $region1: #{tpu_custom_call.1} parent=0
    #allocation3 [shape = 'u8[16384]{0}', space=vmem, size = 0x4000, scoped, tag = 'input window, operand 0']
    #allocation4 [shape = 's32[2]{0}', space=sflag, size = 0x8, scoped, tag = 'scoped memory for tpu_custom_call.1']
    #allocation5 [shape = 's32[2]{0}', space=sflag, size = 0x8, scoped, tag = 'scoped memory for tpu_custom_call.1']
    #allocation6 [shape = 'u8[16384]{0}', space=vmem, size = 0x4000, scoped, tag = 'output window, operand 0']
    %6 = vsyncpa [#allocation4], 0
    %s7 = scalar_lea.sflag [#allocation4], 1
    %8 = vsyncpa %s7, 0
    %9 = vsyncpa [#allocation5], 0
    %s10 = scalar_lea.sflag [#allocation5], 1
    %11 = vsyncpa %s10, 0
    loop: start=0, step=1, limit=18
    $region2: #{tpu_custom_call.1} parent=1 // loop_pre_header
      _
    $region3: #{tpu_custom_call.1} parent=1 // loop_header
      %s13 = sphi 0, %s17
      %p14 = scmp.ge.s32.totalorder %s13, 18
      %s20 = sphi 0, %s46
      %s21 = sphi 0, %s42
      %s22 = sphi 0, %s38
      %s23 = sphi 0, %s34
      %s24 = sphi 0, %s20
      %s25 = sphi 0, %s21
      %s26 = sphi 0, %s22
      %s27 = sphi 0, %s23
      %s28 = sphi 0, %s24
      %s29 = sphi 0, %s25
      %s30 = sphi 0, %s26
      %s31 = sphi 0, %s27
      %s55 = sphi 0, %s57
      %s58 = sphi 0, %s55
      %s59 = sphi 0, %s58
      %s75 = sphi 0, %s59
      %s85 = sphi 0, %s87
      %s88 = sphi 0, %s85
      %s89 = sphi 0, %s88
      %s105 = sphi 0, %s89
    $region4: #{tpu_custom_call.1} parent=1 // loop_header_branch
      %16 = sbr.rel (%p14) target = $region8
    $region5: #{tpu_custom_call.1} parent=1 // loop_body
      %s18 = ssub.s32 %s13, 1
      %s19 = ssub.s32 %s13, 2
      %s32 = sadd.s32 1, %s23
      %p33 = scmp.ge.s32.totalorder %s32, 4
      %s34 = scalar_select %p33, 0, %s32
      %s35 = sadd.s32 1, %s22
      %s36 = scalar_select %p33, %s35, %s22
      %p37 = scmp.ge.s32.totalorder %s36, 1
      %s38 = scalar_select %p37, 0, %s36
      %s39 = sadd.s32 1, %s21
      %s40 = scalar_select %p37, %s39, %s21
      %p41 = scmp.ge.s32.totalorder %s40, 1
      %s42 = scalar_select %p41, 0, %s40
      %s43 = sadd.s32 1, %s20
      %s44 = scalar_select %p41, %s43, %s20
      %p45 = scmp.ge.s32.totalorder %s44, 4
      %s46 = scalar_select %p45, 0, %s44
      %s47 = ssub.s32 %s23, %s34
      %s48 = ssub.s32 %s20, %s46
      %s49 = sor.u32 %s47, %s48
      %s50 = ssub.s32 %s21, %s42
      %s51 = sor.u32 %s49, %s50
      %s52 = ssub.s32 %s22, %s38
      %s53 = sor.u32 %s51, %s52
      %p54 = scmp.eq.s32.totalorder %s53, 0
      %s56 = sadd.s32 %s55, 1
      %s57 = scalar_select %p54, %s55, %s56
      %p60 = pneg %p54
      %p61 = scmp.eq.s32.totalorder %s13, 15
      %p62 = por %p60, %p61
      %p63 = scmp.ne.s32.totalorder %s55, %s58
      %p64 = scmp.eq.s32.totalorder %s13, 0
      %p65 = por %p63, %p64
      %p66 = scmp.ne.s32.totalorder %s55, %s58
      %p67 = scmp.eq.s32.totalorder %s18, 15
      %p68 = por %p66, %p67
      %p69 = scmp.ne.s32.totalorder %s58, %s59
      %p70 = scmp.eq.s32.totalorder %s18, 0
      %p71 = por %p69, %p70
      %p72 = scmp.ne.s32.totalorder %s58, %s59
      %p73 = scmp.eq.s32.totalorder %s19, 15
      %p74 = por %p72, %p73
      %p76 = scmp.ne.s32.totalorder %s59, %s75
      %p77 = scmp.eq.s32.totalorder %s19, 0
      %p78 = por %p76, %p77
      %s79 = ssub.s32 %s20, %s46
      %s80 = ssub.s32 %s21, %s42
      %s81 = sor.u32 %s79, %s80
      %s82 = ssub.s32 %s22, %s38
      %s83 = sor.u32 %s81, %s82
      %p84 = scmp.eq.s32.totalorder %s83, 0
      %s86 = sadd.s32 %s85, 1
      %s87 = scalar_select %p84, %s85, %s86
      %p90 = pneg %p84
      %p91 = scmp.eq.s32.totalorder %s13, 15
      %p92 = por %p90, %p91
      %p93 = scmp.ne.s32.totalorder %s85, %s88
      %p94 = scmp.eq.s32.totalorder %s13, 0
      %p95 = por %p93, %p94
      %p96 = scmp.ne.s32.totalorder %s85, %s88
      %p97 = scmp.eq.s32.totalorder %s18, 15
      %p98 = por %p96, %p97
      %p99 = scmp.ne.s32.totalorder %s88, %s89
      %p100 = scmp.eq.s32.totalorder %s18, 0
      %p101 = por %p99, %p100
      %p102 = scmp.ne.s32.totalorder %s88, %s89
      %p103 = scmp.eq.s32.totalorder %s19, 15
      %p104 = por %p102, %p103
      %p106 = scmp.ne.s32.totalorder %s89, %s105
      %p107 = scmp.eq.s32.totalorder %s19, 0
      %p108 = por %p106, %p107
      %p109 = scmp.le.s32.totalorder 1, %s13
      %p110 = scmp.lt.s32.totalorder %s13, 17
      %p111 = pnand %p109, %p110
      %p112 = pneg %p111
      // Predicated region
      $region9: #{tpu_custom_call.1} parent=5 // pred_check
        _
      $region10: #{tpu_custom_call.1} parent=5 // pred_check_branch
        %114 = sbr.rel (%p111) target = $region12
      $region11: #{tpu_custom_call.1} parent=5 // pred_region
        %s115 = ssub.s32 %s13, 1
      $region12: #{tpu_custom_call.1} parent=5 // pred_fallthru
        _
      %p116 = scmp.lt.s32.totalorder %s13, 16
      // Predicated region
      $region13: #{tpu_custom_call.1} parent=5 // pred_check
        %p117 = pneg %p116
      $region14: #{tpu_custom_call.1} parent=5 // pred_check_branch
        %119 = sbr.rel (%p117) target = $region16
      $region15: #{tpu_custom_call.1} parent=5 // pred_region
        // Predicated region
        $region17: #{tpu_custom_call.1} parent=15 // pred_check
          %p120 = pneg %p65
        $region18: #{tpu_custom_call.1} parent=15 // pred_check_branch
          %122 = sbr.rel (%p120) target = $region20
        $region19: #{tpu_custom_call.1} parent=15 // pred_region
          %s123 = sand.u32 %s55, 1
          %s124 = scalar_lea.sflag [#allocation4], %s123
          %s125 = sand.u32 %s55, 1
          %s126 = smul.addr %s125, 16
          %s127 = scalar_lea.vmem [#allocation3], %s126
          %s128 = smul.u32 2, %s21
          %s130 = ssub.s32 256, 256
          %131 = vsyncadd %s124, %s130
          %s132 = sadd.s32 %s22, %s128
          %s133 = smul.addr %s20, 2
          %s134 = sadd.s32 %s132, %s133
          %s135 = smul.addr %s23, 8
          %s136 = sadd.s32 %s134, %s135
          %s137 = smul.addr %s136, 128
          %s138 = scalar_lea.hbm %s0, %s137
          %s139 = sshll.u32 %s127, 4
          %s140 = int_to_ptr.vmem [resolvable:$true] %s139
          %145 = dma.hbm_to_vmem [thread:$0]  %s138, 256, %s140, %s124, 128, 128, 8
        $region20: #{tpu_custom_call.1} parent=15 // pred_fallthru
          _
      $region16: #{tpu_custom_call.1} parent=5 // pred_fallthru
        _
      %p146 = scmp.le.s32.totalorder 1, %s13
      %p147 = scmp.lt.s32.totalorder %s13, 17
      %p148 = pnand %p146, %p147
      %p149 = pneg %p148
      // Predicated region
      $region21: #{tpu_custom_call.1} parent=5 // pred_check
        _
      $region22: #{tpu_custom_call.1} parent=5 // pred_check_branch
        %151 = sbr.rel (%p148) target = $region24
      $region23: #{tpu_custom_call.1} parent=5 // pred_region
        %s152 = ssub.s32 %s13, 1
        %s153 = sand.u32 %s58, 1
        %s154 = scalar_lea.sflag [#allocation4], %s153
        %s155 = sand.u32 %s58, 1
        %s156 = smul.addr %s155, 16
        %s157 = scalar_lea.vmem [#allocation3], %s156
        // Predicated region
        $region25: #{tpu_custom_call.1} parent=23 // pred_check
          %p158 = pneg %p71
        $region26: #{tpu_custom_call.1} parent=23 // pred_check_branch
          %160 = sbr.rel (%p158) target = $region28
        $region27: #{tpu_custom_call.1} parent=23 // pred_region
          %161 = dma.done %s154, 256
        $region28: #{tpu_custom_call.1} parent=23 // pred_fallthru
          _
        %s162 = sand.u32 %s58, 1
        %s163 = scalar_lea.sflag [#allocation4], %s162
        %s164 = sand.u32 %s58, 1
        %s165 = smul.addr %s164, 16
        %s166 = scalar_lea.vmem [#allocation3], %s165
        %p167 = pneg %p71
        %p168 = pneg %p68
        %p169 = pneg %p101
        %p170 = pneg %p98
        %s171 = sand.u32 %s88, 1
        %s172 = scalar_lea.sflag [#allocation5], %s171
        %s173 = sand.u32 %s88, 1
        %s174 = smul.addr %s173, 16
        %s175 = scalar_lea.vmem [#allocation6], %s174
        %s176 = smul.u32 2, %s25
        %s177 = smul.u32 2, %s25
        %p178 = scmp.eq.s32.totalorder %s27, 0
        // Predicated region
        $region29: #{tpu_custom_call.1} parent=23 // pred_check
          %p179 = pneg %p178
        $region30: #{tpu_custom_call.1} parent=23 // pred_check_branch
          %181 = sbr.rel (%p179) target = $region32
        $region31: #{tpu_custom_call.1} parent=23 // pred_region
          %182 = vst [vmem:[#allocation2] sm:$0xff] 0.0
          %183 = vst [vmem:[#allocation2 + $0x8] sm:$0xff] 0.0
        $region32: #{tpu_custom_call.1} parent=23 // pred_fallthru
          _
        %v184 = vld [vmem:[#allocation2] sm:$0xff]
        %v185 = vld [vmem:[#allocation2 + $0x8] sm:$0xff]
        %v186 = vld [vmem:[%s157] sm:$0xff]
        %v187 = vld [vmem:[%s157 + $0x8] sm:$0xff]
        %v188 = vadd.f32 %v184, %v186
        %v189 = vadd.f32 %v185, %v187
        %190 = vst [vmem:[#allocation2] sm:$0xff] %v188
        %191 = vst [vmem:[#allocation2 + $0x8] sm:$0xff] %v189
        %p192 = scmp.eq.s32.totalorder %s27, 3
        // Predicated region
        $region33: #{tpu_custom_call.1} parent=23 // pred_check
          %p193 = pneg %p192
        $region34: #{tpu_custom_call.1} parent=23 // pred_check_branch
          %195 = sbr.rel (%p193) target = $region36
        $region35: #{tpu_custom_call.1} parent=23 // pred_region
          %v196 = vld [vmem:[#allocation2] sm:$0xff]
          %v197 = vld [vmem:[#allocation2 + $0x8] sm:$0xff]
          %198 = vst [vmem:[%s175] sm:$0xff] %v196
          %199 = vst [vmem:[%s175 + $0x8] sm:$0xff] %v197
        $region36: #{tpu_custom_call.1} parent=23 // pred_fallthru
          _
        %s200 = sand.u32 %s88, 1
        %s201 = scalar_lea.sflag [#allocation5], %s200
        %s202 = sand.u32 %s88, 1
        %s203 = smul.addr %s202, 16
        %s204 = scalar_lea.vmem [#allocation6], %s203
        // Predicated region
        $region37: #{tpu_custom_call.1} parent=23 // pred_check
          %p205 = pneg %p98
        $region38: #{tpu_custom_call.1} parent=23 // pred_check_branch
          %207 = sbr.rel (%p205) target = $region40
        $region39: #{tpu_custom_call.1} parent=23 // pred_region
          %s208 = smul.u32 2, %s25
          %s210 = ssub.s32 256, 256
          %211 = vsyncadd %s201, %s210
          %s212 = sadd.s32 %s26, %s208
          %s213 = smul.addr %s24, 2
          %s214 = sadd.s32 %s212, %s213
          %s215 = smul.addr %s214, 128
          %s216 = scalar_lea.hbm %s1, %s215
          %s217 = sshll.u32 %s204, 4
          %s218 = int_to_ptr.vmem [resolvable:$true] %s217
          %223 = dma.vmem_to_hbm [thread:$0]  %s218, 256, %s216, %s201, 128, 128, 8
        $region40: #{tpu_custom_call.1} parent=23 // pred_fallthru
          _
      $region24: #{tpu_custom_call.1} parent=5 // pred_fallthru
        _
      %p224 = scmp.le.s32.totalorder 2, %s13
      // Predicated region
      $region41: #{tpu_custom_call.1} parent=5 // pred_check
        %p225 = pneg %p224
      $region42: #{tpu_custom_call.1} parent=5 // pred_check_branch
        %227 = sbr.rel (%p225) target = $region44
      $region43: #{tpu_custom_call.1} parent=5 // pred_region
        %s228 = ssub.s32 %s13, 2
        // Predicated region
        $region45: #{tpu_custom_call.1} parent=43 // pred_check
          %p229 = pneg %p104
        $region46: #{tpu_custom_call.1} parent=43 // pred_check_branch
          %231 = sbr.rel (%p229) target = $region48
        $region47: #{tpu_custom_call.1} parent=43 // pred_region
          %s232 = sand.u32 %s89, 1
          %s233 = scalar_lea.sflag [#allocation5], %s232
          %s234 = sand.u32 %s89, 1
          %s235 = smul.addr %s234, 16
          %s236 = scalar_lea.vmem [#allocation6], %s235
          %237 = dma.done %s233, 256
        $region48: #{tpu_custom_call.1} parent=43 // pred_fallthru
          _
      $region44: #{tpu_custom_call.1} parent=5 // pred_fallthru
        _
    $region6: #{tpu_custom_call.1} parent=1 // loop_footer
      %s17 = sadd.s32 1, %s13
    $region7: #{tpu_custom_call.1} parent=1 // loop_footer_branch
      %12 = sbr.rel target = $region3
    $region8: #{tpu_custom_call.1} parent=1 // loop_exit
      _
    %238 = vsyncpa [#allocation4], 1
    %s239 = scalar_lea.sflag [#allocation4], 1
    %240 = vsyncpa %s239, 1
    %241 = vsyncpa [#allocation5], 1
    %s242 = scalar_lea.sflag [#allocation5], 1
    %243 = vsyncpa %s242, 1

</llo_original>
